<compile_context>
chip_gen: v7x
topology: tpu7x:2x2x1
jax: 0.10.0
libtpu: 0.0.40
codegen_flags: <defaults>
</compile_context>

<pallas_src>
import jax
import jax.numpy as jnp
from jax.experimental import pallas as pl
from jax.experimental.pallas import tpu as pltpu

IN_DIM = 256      # FC1 input features
OUT_DIM = 257     # FC1/FC2 output features (ragged)
PAD_DIM = 384     # 257 padded up to 3*128 for lane-dense layout


def _round_up(n, m):
    return ((n + m - 1) // m) * m


def _cdiv(a, b):
    return (a + b - 1) // b


def _fc_kernel(x_ref, w1_ref, b1_ref, w2_ref, b2_ref, o_ref):
    # x_ref:  (TM, 256)  f32   (cast to MXU dtype in-kernel; hides under DMA)
    # w1_ref: (256, 384)       (f32 or bf16, zero-padded cols 257..383)
    # b1_ref: (1, 384)   f32
    # w2_ref: (384, 384)       (zero-padded rows/cols 257..383)
    # b2_ref: (1, 384)   f32
    # o_ref:  (TM, 384)  f32 or bf16
    x = x_ref[...].astype(w1_ref.dtype)
    h = jnp.dot(x, w1_ref[...], preferred_element_type=jnp.float32)
    h = jnp.maximum(h + b1_ref[...], 0.0)                        # bias + ReLU in f32
    y = jnp.dot(h.astype(w2_ref.dtype), w2_ref[...],
                preferred_element_type=jnp.float32) + b2_ref[...]
    # sigmoid(y) = 0.5 * (tanh(y/2) + 1): single EUP op per element, exact.
    o_ref[...] = (0.5 * (jnp.tanh(0.5 * y) + 1.0)).astype(o_ref.dtype)


def prepare_params(w1, b1, w2, b2, *, use_bf16=True):
    """One-time weight prep: transpose to (in,out), zero-pad 257->384, cast.

    w1: (257,256), b1: (257,), w2: (257,257), b2: (257,)  (torch nn.Linear layout)
    """
    wdtype = jnp.bfloat16 if use_bf16 else jnp.float32
    w1_p = jnp.zeros((IN_DIM, PAD_DIM), jnp.float32).at[:, :OUT_DIM].set(w1.T)
    w2_p = jnp.zeros((PAD_DIM, PAD_DIM), jnp.float32).at[:OUT_DIM, :OUT_DIM].set(w2.T)
    b1_p = jnp.zeros((1, PAD_DIM), jnp.float32).at[0, :OUT_DIM].set(b1)
    b2_p = jnp.zeros((1, PAD_DIM), jnp.float32).at[0, :OUT_DIM].set(b2)
    return (w1_p.astype(wdtype), b1_p, w2_p.astype(wdtype), b2_p)


def _choose_tile(M, tm):
    """Row tile: multiple of 8 sublanes, minimal padding, >=2 grid steps when possible."""
    if M <= 8:
        return 8, 8
    n_steps = max(2, _cdiv(M, tm))          # >=2 so v7x megacore shards the M axis
    TM = _round_up(_cdiv(M, n_steps), 8)
    return TM, n_steps * TM


def fc_forward(x, params, tm=1024, out_dtype=jnp.float32):
    """x: (..., 256) f32.  params from prepare_params().  Returns (..., 257) out_dtype."""
    w1_p, b1_p, w2_p, b2_p = params
    lead = x.shape[:-1]
    x2d = x.reshape(-1, IN_DIM)             # stays f32; cast happens in-kernel
    M = x2d.shape[0]

    TM, M_pad = _choose_tile(M, tm)
    if M_pad != M:
        x2d = jnp.pad(x2d, ((0, M_pad - M), (0, 0)))

    out_itemsize = jnp.dtype(out_dtype).itemsize
    wbytes = sum(int(a.size) * a.dtype.itemsize for a in params)

    cost = pl.CostEstimate(
        flops=2 * M_pad * (IN_DIM * PAD_DIM + PAD_DIM * PAD_DIM),
        transcendentals=M_pad * PAD_DIM,                          # one tanh / element
        bytes_accessed=M_pad * IN_DIM * 4 + wbytes + M_pad * PAD_DIM * out_itemsize,
    )

    # VMEM footprint: double-buffered x (f32) + double-buffered out + weights
    # (2 buffers each) + in-kernel f32 intermediates.  Set the scoped limit
    # explicitly so big tiles still lower on v5e's 16 MiB default.
    vmem_est = (2 * TM * IN_DIM * 4
                + 2 * TM * PAD_DIM * out_itemsize
                + 2 * wbytes
                + 3 * TM * PAD_DIM * 4)
    vmem_limit = min(max(int(vmem_est * 3) // 2, 16 << 20), 48 << 20)

    out = pl.pallas_call(
        _fc_kernel,
        out_shape=jax.ShapeDtypeStruct((M_pad, PAD_DIM), out_dtype),
        grid=(M_pad // TM,),
        in_specs=[
            pl.BlockSpec((TM, IN_DIM), lambda i: (i, 0)),         # x: tiled over M
            pl.BlockSpec((IN_DIM, PAD_DIM), lambda i: (0, 0)),    # w1: VMEM-resident
            pl.BlockSpec((1, PAD_DIM), lambda i: (0, 0)),         # b1: VMEM-resident
            pl.BlockSpec((PAD_DIM, PAD_DIM), lambda i: (0, 0)),   # w2: VMEM-resident
            pl.BlockSpec((1, PAD_DIM), lambda i: (0, 0)),         # b2: VMEM-resident
        ],
        out_specs=pl.BlockSpec((TM, PAD_DIM), lambda i: (i, 0)),
        compiler_params=pltpu.CompilerParams(
            dimension_semantics=("parallel",),                    # megacore on v7x
            vmem_limit_bytes=vmem_limit),
        cost_estimate=cost,
    )(x2d, w1_p, b1_p, w2_p, b2_p)

    # NOTE: padded columns 257..383 hold sigmoid(0)=0.5, not 0; they are sliced
    # off here.  When composing inside a larger jit, the slice fuses into the
    # consumer (or return the padded buffer directly and slice downstream).
    return out[:M, :OUT_DIM].reshape(*lead, OUT_DIM)


def init_params(key, in_dim=IN_DIM, hid=OUT_DIM, out_dim=OUT_DIM):
    """Deterministic init mirroring nn.Linear's (out,in) weight / (out,) bias shapes."""
    k1, k2, k3, k4 = jax.random.split(key, 4)
    bound1 = 1.0 / (in_dim ** 0.5)
    bound2 = 1.0 / (hid ** 0.5)
    w1 = jax.random.uniform(k1, (hid, in_dim), jnp.float32, -bound1, bound1)
    b1 = jax.random.uniform(k2, (hid,), jnp.float32, -bound1, bound1)
    w2 = jax.random.uniform(k3, (out_dim, hid), jnp.float32, -bound2, bound2)
    b2 = jax.random.uniform(k4, (out_dim,), jnp.float32, -bound2, bound2)
    return w1, b1, w2, b2


if __name__ == "__main__":
    key = jax.random.PRNGKey(0)
    kx, kp = jax.random.split(key)

    B, T = 2, 8                          # small batch/seq; feature dim fixed at 256
    x = jax.random.normal(kx, (B, T, IN_DIM), jnp.float32)
    w1, b1, w2, b2 = init_params(kp)

    # Pure-JAX f32 reference.
    ref = jax.nn.sigmoid(jnp.maximum(x @ w1.T + b1, 0.0) @ w2.T + b2)

    fc = jax.jit(fc_forward, static_argnames=("tm", "out_dtype"))

    # f32 weights + f32 output: matches the PyTorch module closely (exact tanh sigmoid).
    p32 = prepare_params(w1, b1, w2, b2, use_bf16=False)
    y32 = jax.block_until_ready(fc(x, p32))
    assert y32.shape == (B, T, OUT_DIM), y32.shape
    assert jnp.allclose(y32, ref, atol=1e-5, rtol=1e-5), "f32 mismatch vs reference"

    # bf16 MXU weights + bf16 output (default perf config): looser tolerance.
    p16 = prepare_params(w1, b1, w2, b2, use_bf16=True)
    y16 = jax.block_until_ready(fc(x, p16, out_dtype=jnp.bfloat16))
    assert y16.shape == (B, T, OUT_DIM), y16.shape
    assert jnp.allclose(y16.astype(jnp.float32), ref, atol=3e-2, rtol=3e-2), \
        "bf16 mismatch vs reference"

    print("KERNEL_OK")
</pallas_src>

<mosaic_0001>
module attributes {stable_mosaic.version = 11 : i64} {
  func.func @_fc_kernel(%arg0: i32, %arg1: memref<8x256xf32, #tpu.memory_space<vmem>>, %arg2: memref<256x384xf32, #tpu.memory_space<vmem>>, %arg3: memref<1x384xf32, #tpu.memory_space<vmem>>, %arg4: memref<384x384xf32, #tpu.memory_space<vmem>>, %arg5: memref<1x384xf32, #tpu.memory_space<vmem>>, %arg6: memref<8x384xf32, #tpu.memory_space<vmem>>) attributes {dimension_semantics = [#tpu.dimension_semantics<parallel>], iteration_bounds = array<i64: 2>, scalar_prefetch = 0 : i64, scratch_operands = 0 : i64, tpu.core_type = #tpu.core_type<tc>, window_params = [{transform_indices = @transform_0, window_bounds = array<i64: 8, 256>}, {pipeline_mode = #tpu.pipeline_mode<synchronous>, transform_indices = @transform_1, window_bounds = array<i64: 256, 384>}, {pipeline_mode = #tpu.pipeline_mode<synchronous>, transform_indices = @transform_2, window_bounds = array<i64: 1, 384>}, {pipeline_mode = #tpu.pipeline_mode<synchronous>, transform_indices = @transform_3, window_bounds = array<i64: 384, 384>}, {pipeline_mode = #tpu.pipeline_mode<synchronous>, transform_indices = @transform_4, window_bounds = array<i64: 1, 384>}, {transform_indices = @transform_5, window_bounds = array<i64: 8, 384>}]} {
    %c0 = arith.constant 0 : index
    %c0_0 = arith.constant 0 : index
    %0 = vector.load %arg1[%c0, %c0_0] : memref<8x256xf32, #tpu.memory_space<vmem>>, vector<8x256xf32>
    %c0_1 = arith.constant 0 : index
    %c0_2 = arith.constant 0 : index
    %1 = vector.load %arg2[%c0_1, %c0_2] : memref<256x384xf32, #tpu.memory_space<vmem>>, vector<256x384xf32>
    %cst = arith.constant dense<0.000000e+00> : vector<8x384xf32>
    %2 = tpu.matmul %0, %1, %cst {dimension_numbers = #tpu.dot_dimension_numbers<[1], [0], [0], [1], [0, 0, 1, 1], [], []>} : vector<8x256xf32>, vector<256x384xf32>, vector<8x384xf32> -> vector<8x384xf32>
    %c0_3 = arith.constant 0 : index
    %c0_4 = arith.constant 0 : index
    %3 = vector.load %arg3[%c0_3, %c0_4] : memref<1x384xf32, #tpu.memory_space<vmem>>, vector<1x384xf32>
    %4 = vector.broadcast %3 : vector<1x384xf32> to vector<8x384xf32>
    %5 = arith.addf %2, %4 : vector<8x384xf32>
    %cst_5 = arith.constant 0.000000e+00 : f32
    %6 = vector.broadcast %cst_5 : f32 to vector<8x384xf32>
    %7 = arith.maximumf %5, %6 : vector<8x384xf32>
    %c0_6 = arith.constant 0 : index
    %c0_7 = arith.constant 0 : index
    %8 = vector.load %arg4[%c0_6, %c0_7] : memref<384x384xf32, #tpu.memory_space<vmem>>, vector<384x384xf32>
    %cst_8 = arith.constant dense<0.000000e+00> : vector<8x384xf32>
    %9 = tpu.matmul %7, %8, %cst_8 {dimension_numbers = #tpu.dot_dimension_numbers<[1], [0], [0], [1], [0, 0, 1, 1], [], []>} : vector<8x384xf32>, vector<384x384xf32>, vector<8x384xf32> -> vector<8x384xf32>
    %c0_9 = arith.constant 0 : index
    %c0_10 = arith.constant 0 : index
    %10 = vector.load %arg5[%c0_9, %c0_10] : memref<1x384xf32, #tpu.memory_space<vmem>>, vector<1x384xf32>
    %11 = vector.broadcast %10 : vector<1x384xf32> to vector<8x384xf32>
    %12 = arith.addf %9, %11 : vector<8x384xf32>
    %cst_11 = arith.constant 5.000000e-01 : f32
    %13 = vector.broadcast %cst_11 : f32 to vector<8x384xf32>
    %14 = arith.mulf %13, %12 : vector<8x384xf32>
    %15 = math.tanh %14 : vector<8x384xf32>
    %cst_12 = arith.constant 1.000000e+00 : f32
    %16 = vector.broadcast %cst_12 : f32 to vector<8x384xf32>
    %17 = arith.addf %15, %16 : vector<8x384xf32>
    %cst_13 = arith.constant 5.000000e-01 : f32
    %18 = vector.broadcast %cst_13 : f32 to vector<8x384xf32>
    %19 = arith.mulf %18, %17 : vector<8x384xf32>
    %c0_14 = arith.constant 0 : index
    %c0_15 = arith.constant 0 : index
    %20 = vector.load %arg6[%c0_14, %c0_15] : memref<8x384xf32, #tpu.memory_space<vmem>>, vector<8x384xf32>
    tpu.vector_store %arg6[%c0_14, %c0_15], %19 {strides = array<i32>} : memref<8x384xf32, #tpu.memory_space<vmem>>, vector<8x384xf32>,
    return
  }
  func.func @transform_0(%arg0: i32) -> (i32, i32) {
    %c0_i32 = arith.constant 0 : i32
    %c0_i32_0 = arith.constant 0 : i32
    return %arg0, %c0_i32 : i32, i32
  }
  func.func @transform_1(%arg0: i32) -> (i32, i32) {
    %c0_i32 = arith.constant 0 : i32
    %c0_i32_0 = arith.constant 0 : i32
    %c0_i32_1 = arith.constant 0 : i32
    return %c0_i32, %c0_i32_0 : i32, i32
  }
  func.func @transform_2(%arg0: i32) -> (i32, i32) {
    %c0_i32 = arith.constant 0 : i32
    %c0_i32_0 = arith.constant 0 : i32
    %c0_i32_1 = arith.constant 0 : i32
    return %c0_i32, %c0_i32_0 : i32, i32
  }
  func.func @transform_3(%arg0: i32) -> (i32, i32) {
    %c0_i32 = arith.constant 0 : i32
    %c0_i32_0 = arith.constant 0 : i32
    %c0_i32_1 = arith.constant 0 : i32
    return %c0_i32, %c0_i32_0 : i32, i32
  }
  func.func @transform_4(%arg0: i32) -> (i32, i32) {
    %c0_i32 = arith.constant 0 : i32
    %c0_i32_0 = arith.constant 0 : i32
    %c0_i32_1 = arith.constant 0 : i32
    return %c0_i32, %c0_i32_0 : i32, i32
  }
  func.func @transform_5(%arg0: i32) -> (i32, i32) {
    %c0_i32 = arith.constant 0 : i32
    %c0_i32_0 = arith.constant 0 : i32
    return %arg0, %c0_i32 : i32, i32
  }
}

</mosaic_0001>

<llo_original>
// kernel: fc_forward.1
$region0: #{fc_forward.1}
  #allocation0 [shape = 'u32[]', space=smem, size = 0x4, offset = 0x4, fixed_abs, tag = 'smem constant byte address 0x4 - core index']
  #allocation1 [shape = 'u32[144,128]{1,0:T(1,128)}', space=vmem, size = 0x12000, scoped, tag = 'internal scratch']
  %s0 = inlined_call_operand.hbm [shape: f32[16,256], index: 0, kind: input, shape index: {}]
  %s1 = inlined_call_operand.hbm [shape: f32[256,384], index: 1, kind: input, shape index: {}]
  %s2 = inlined_call_operand.vmem [shape: f32[1,384], index: 2, kind: input, shape index: {}]
  %s3 = inlined_call_operand.hbm [shape: f32[384,384], index: 3, kind: input, shape index: {}]
  %s4 = inlined_call_operand.vmem [shape: f32[1,384], index: 4, kind: input, shape index: {}]
  %s5 = inlined_call_operand.vmem [shape: f32[16,384], index: 5, kind: output, shape index: {}]
  %s6 = sld [smem:[#allocation0]]
  $region65: #{fc_forward.1} parent=0
    _
  %s8 = ssub.s32 1, %s6
  %s9 = scalar_select 0, %s8, %s6
  $region1: #{fc_forward.1} parent=0
    #allocation2 [shape = 'u8[16384]{0}', space=vmem, size = 0x4000, scoped, tag = 'input window, operand 0']
    #allocation3 [shape = 's32[2]{0}', space=sflag, size = 0x8, scoped, tag = 'scoped memory for fc_forward.1']
    #allocation4 [shape = 'u8[393216]{0}', space=vmem, size = 0x60000, scoped, tag = 'input window, operand 1, single buffered']
    #allocation5 [shape = 's32[1]{0}', space=sflag, size = 0x4, scoped, tag = 'scoped memory for fc_forward.1']
    #allocation6 [shape = 'u8[589824]{0}', space=vmem, size = 0x90000, scoped, tag = 'input window, operand 3, single buffered']
    %10 = vsyncpa [#allocation3], 0
    %s11 = scalar_lea.sflag [#allocation3], 1
    %12 = vsyncpa %s11, 0
    %13 = vsyncpa [#allocation5], 0
    loop: start=0, step=1, limit=4
    $region2: #{fc_forward.1} parent=1 // loop_pre_header
      _
    $region3: #{fc_forward.1} parent=1 // loop_header
      %s15 = sphi 0, %s19
      %p16 = scmp.ge.s32.totalorder %s15, 4
      %s25 = sphi 0, %s27
      %s28 = sphi 0, %s25
      %s29 = sphi 0, %s28
      %s45 = sphi 0, %s29
      %s49 = sphi 0, %s49
      %s51 = sphi 0, %s49
      %s52 = sphi 0, %s51
      %s66 = sphi 0, %s52
      %s70 = sphi 0, %s70
      %s72 = sphi 0, %s70
      %s73 = sphi 0, %s72
      %s87 = sphi 0, %s73
      %s91 = sphi 0, %s91
      %s93 = sphi 0, %s91
      %s94 = sphi 0, %s93
      %s108 = sphi 0, %s94
      %s112 = sphi 0, %s112
      %s114 = sphi 0, %s112
      %s115 = sphi 0, %s114
      %s129 = sphi 0, %s115
      %s135 = sphi 0, %s137
      %s138 = sphi 0, %s135
      %s139 = sphi 0, %s138
      %s155 = sphi 0, %s139
    $region4: #{fc_forward.1} parent=1 // loop_header_branch
      %18 = sbr.rel (%p16) target = $region8
    $region5: #{fc_forward.1} parent=1 // loop_body
      %s20 = ssub.s32 %s15, 1
      %s21 = ssub.s32 %s15, 2
      %s22 = sadd.s32 %s15, 1
      %s23 = ssub.s32 %s15, %s22
      %p24 = scmp.eq.s32.totalorder %s23, 0
      %s26 = sadd.s32 %s25, 1
      %s27 = scalar_select %p24, %s25, %s26
      %p30 = pneg %p24
      %p31 = scmp.eq.s32.totalorder %s15, 1
      %p32 = por %p30, %p31
      %p33 = scmp.ne.s32.totalorder %s25, %s28
      %p34 = scmp.eq.s32.totalorder %s15, 0
      %p35 = por %p33, %p34
      %p36 = scmp.ne.s32.totalorder %s25, %s28
      %p37 = scmp.eq.s32.totalorder %s20, 1
      %p38 = por %p36, %p37
      %p39 = scmp.ne.s32.totalorder %s28, %s29
      %p40 = scmp.eq.s32.totalorder %s20, 0
      %p41 = por %p39, %p40
      %p42 = scmp.ne.s32.totalorder %s28, %s29
      %p43 = scmp.eq.s32.totalorder %s21, 1
      %p44 = por %p42, %p43
      %p46 = scmp.ne.s32.totalorder %s29, %s45
      %p47 = scmp.eq.s32.totalorder %s21, 0
      %p48 = por %p46, %p47
      %s50 = sadd.s32 %s49, 1
      %p53 = scmp.eq.s32.totalorder %s15, 1
      %p54 = scmp.ne.s32.totalorder %s49, %s51
      %p55 = scmp.eq.s32.totalorder %s15, 0
      %p56 = por %p54, %p55
      %p57 = scmp.ne.s32.totalorder %s49, %s51
      %p58 = scmp.eq.s32.totalorder %s20, 1
      %p59 = por %p57, %p58
      %p60 = scmp.ne.s32.totalorder %s51, %s52
      %p61 = scmp.eq.s32.totalorder %s20, 0
      %p62 = por %p60, %p61
      %p63 = scmp.ne.s32.totalorder %s51, %s52
      %p64 = scmp.eq.s32.totalorder %s21, 1
      %p65 = por %p63, %p64
      %p67 = scmp.ne.s32.totalorder %s52, %s66
      %p68 = scmp.eq.s32.totalorder %s21, 0
      %p69 = por %p67, %p68
      %s71 = sadd.s32 %s70, 1
      %p74 = scmp.eq.s32.totalorder %s15, 1
      %p75 = scmp.ne.s32.totalorder %s70, %s72
      %p76 = scmp.eq.s32.totalorder %s15, 0
      %p77 = por %p75, %p76
      %p78 = scmp.ne.s32.totalorder %s70, %s72
      %p79 = scmp.eq.s32.totalorder %s20, 1
      %p80 = por %p78, %p79
      %p81 = scmp.ne.s32.totalorder %s72, %s73
      %p82 = scmp.eq.s32.totalorder %s20, 0
      %p83 = por %p81, %p82
      %p84 = scmp.ne.s32.totalorder %s72, %s73
      %p85 = scmp.eq.s32.totalorder %s21, 1
      %p86 = por %p84, %p85
      %p88 = scmp.ne.s32.totalorder %s73, %s87
      %p89 = scmp.eq.s32.totalorder %s21, 0
      %p90 = por %p88, %p89
      %s92 = sadd.s32 %s91, 1
      %p95 = scmp.eq.s32.totalorder %s15, 1
      %p96 = scmp.ne.s32.totalorder %s91, %s93
      %p97 = scmp.eq.s32.totalorder %s15, 0
      %p98 = por %p96, %p97
      %p99 = scmp.ne.s32.totalorder %s91, %s93
      %p100 = scmp.eq.s32.totalorder %s20, 1
      %p101 = por %p99, %p100
      %p102 = scmp.ne.s32.totalorder %s93, %s94
      %p103 = scmp.eq.s32.totalorder %s20, 0
      %p104 = por %p102, %p103
      %p105 = scmp.ne.s32.totalorder %s93, %s94
      %p106 = scmp.eq.s32.totalorder %s21, 1
      %p107 = por %p105, %p106
      %p109 = scmp.ne.s32.totalorder %s94, %s108
      %p110 = scmp.eq.s32.totalorder %s21, 0
      %p111 = por %p109, %p110
      %s113 = sadd.s32 %s112, 1
      %p116 = scmp.eq.s32.totalorder %s15, 1
      %p117 = scmp.ne.s32.totalorder %s112, %s114
      %p118 = scmp.eq.s32.totalorder %s15, 0
      %p119 = por %p117, %p118
      %p120 = scmp.ne.s32.totalorder %s112, %s114
      %p121 = scmp.eq.s32.totalorder %s20, 1
      %p122 = por %p120, %p121
      %p123 = scmp.ne.s32.totalorder %s114, %s115
      %p124 = scmp.eq.s32.totalorder %s20, 0
      %p125 = por %p123, %p124
      %p126 = scmp.ne.s32.totalorder %s114, %s115
      %p127 = scmp.eq.s32.totalorder %s21, 1
      %p128 = por %p126, %p127
      %p130 = scmp.ne.s32.totalorder %s115, %s129
      %p131 = scmp.eq.s32.totalorder %s21, 0
      %p132 = por %p130, %p131
      %s133 = ssub.s32 %s15, %s22
      %p134 = scmp.eq.s32.totalorder %s133, 0
      %s136 = sadd.s32 %s135, 1
      %s137 = scalar_select %p134, %s135, %s136
      %p140 = pneg %p134
      %p141 = scmp.eq.s32.totalorder %s15, 1
      %p142 = por %p140, %p141
      %p143 = scmp.ne.s32.totalorder %s135, %s138
      %p144 = scmp.eq.s32.totalorder %s15, 0
      %p145 = por %p143, %p144
      %p146 = scmp.ne.s32.totalorder %s135, %s138
      %p147 = scmp.eq.s32.totalorder %s20, 1
      %p148 = por %p146, %p147
      %p149 = scmp.ne.s32.totalorder %s138, %s139
      %p150 = scmp.eq.s32.totalorder %s20, 0
      %p151 = por %p149, %p150
      %p152 = scmp.ne.s32.totalorder %s138, %s139
      %p153 = scmp.eq.s32.totalorder %s21, 1
      %p154 = por %p152, %p153
      %p156 = scmp.ne.s32.totalorder %s139, %s155
      %p157 = scmp.eq.s32.totalorder %s21, 0
      %p158 = por %p156, %p157
      %p159 = scmp.le.s32.totalorder 1, %s15
      %p160 = scmp.lt.s32.totalorder %s15, 3
      %p161 = pnand %p159, %p160
      %p162 = pneg %p161
      // Predicated region
      $region9: #{fc_forward.1} parent=5 // pred_check
        _
      $region10: #{fc_forward.1} parent=5 // pred_check_branch
        %164 = sbr.rel (%p161) target = $region12
      $region11: #{fc_forward.1} parent=5 // pred_region
        %s165 = ssub.s32 %s15, 1
        // Predicated region
        $region13: #{fc_forward.1} parent=11 // pred_check
          %p166 = pneg %p62
        $region14: #{fc_forward.1} parent=11 // pred_check_branch
          %168 = sbr.rel (%p166) target = $region16
        $region15: #{fc_forward.1} parent=11 // pred_region
          %s170 = ssub.s32 12288, 12288
          %171 = vsyncadd [#allocation5], %s170
          %s172 = sshll.u32 [#allocation4], 4
          %s173 = int_to_ptr.vmem [resolvable:$true] %s172
          %178 = dma.hbm_to_vmem [thread:$0]  %s1, 12288, %s173, [#allocation5], 384, 384, 24
        $region16: #{fc_forward.1} parent=11 // pred_fallthru
          _
        // Predicated region
        $region17: #{fc_forward.1} parent=11 // pred_check
          %p179 = pneg %p83
        $region18: #{fc_forward.1} parent=11 // pred_check_branch
          %181 = sbr.rel (%p179) target = $region20
        $region19: #{fc_forward.1} parent=11 // pred_region
          _
        $region20: #{fc_forward.1} parent=11 // pred_fallthru
          _
        // Predicated region
        $region21: #{fc_forward.1} parent=11 // pred_check
          %p182 = pneg %p104
        $region22: #{fc_forward.1} parent=11 // pred_check_branch
          %184 = sbr.rel (%p182) target = $region24
        $region23: #{fc_forward.1} parent=11 // pred_region
          %s186 = ssub.s32 18432, 18432
          %187 = vsyncadd [#allocation5], %s186
          %s188 = sshll.u32 [#allocation6], 4
          %s189 = int_to_ptr.vmem [resolvable:$true] %s188
          %194 = dma.hbm_to_vmem [thread:$0]  %s3, 18432, %s189, [#allocation5], 384, 384, 24
        $region24: #{fc_forward.1} parent=11 // pred_fallthru
          _
        // Predicated region
        $region25: #{fc_forward.1} parent=11 // pred_check
          %p195 = pneg %p125
        $region26: #{fc_forward.1} parent=11 // pred_check_branch
          %197 = sbr.rel (%p195) target = $region28
        $region27: #{fc_forward.1} parent=11 // pred_region
          _
        $region28: #{fc_forward.1} parent=11 // pred_fallthru
          _
      $region12: #{fc_forward.1} parent=5 // pred_fallthru
        _
      %p198 = scmp.lt.s32.totalorder %s15, 2
      // Predicated region
      $region29: #{fc_forward.1} parent=5 // pred_check
        %p199 = pneg %p198
      $region30: #{fc_forward.1} parent=5 // pred_check_branch
        %201 = sbr.rel (%p199) target = $region32
      $region31: #{fc_forward.1} parent=5 // pred_region
        // Predicated region
        $region33: #{fc_forward.1} parent=31 // pred_check
          %p202 = pneg %p35
        $region34: #{fc_forward.1} parent=31 // pred_check_branch
          %204 = sbr.rel (%p202) target = $region36
        $region35: #{fc_forward.1} parent=31 // pred_region
          %s205 = sand.u32 %s25, 1
          %s206 = scalar_lea.sflag [#allocation3], %s205
          %s207 = sand.u32 %s25, 1
          %s208 = smul.addr %s207, 16
          %s209 = scalar_lea.vmem [#allocation2], %s208
          %s211 = ssub.s32 256, 256
          %212 = vsyncadd %s206, %s211
          %s213 = smul.addr %s15, 2
          %s214 = smul.addr %s213, 128
          %s215 = scalar_lea.hbm %s0, %s214
          %s217 = sshll.u32 %s209, 4
          %s218 = int_to_ptr.vmem [resolvable:$true] %s217
          %220 = dma.hbm_to_vmem [thread:$0]  %s215, 256, %s218, %s206
        $region36: #{fc_forward.1} parent=31 // pred_fallthru
          _
      $region32: #{fc_forward.1} parent=5 // pred_fallthru
        _
      %p221 = scmp.le.s32.totalorder 1, %s15
      %p222 = scmp.lt.s32.totalorder %s15, 3
      %p223 = pnand %p221, %p222
      %p224 = pneg %p223
      // Predicated region
      $region37: #{fc_forward.1} parent=5 // pred_check
        _
      $region38: #{fc_forward.1} parent=5 // pred_check_branch
        %226 = sbr.rel (%p223) target = $region40
      $region39: #{fc_forward.1} parent=5 // pred_region
        %s227 = ssub.s32 %s15, 1
        %s228 = sand.u32 %s28, 1
        %s229 = scalar_lea.sflag [#allocation3], %s228
        %s230 = sand.u32 %s28, 1
        %s231 = smul.addr %s230, 16
        %s232 = scalar_lea.vmem [#allocation2], %s231
        // Predicated region
        $region41: #{fc_forward.1} parent=39 // pred_check
          %p233 = pneg %p41
        $region42: #{fc_forward.1} parent=39 // pred_check_branch
          %235 = sbr.rel (%p233) target = $region44
        $region43: #{fc_forward.1} parent=39 // pred_region
          %236 = dma.done %s229, 256
        $region44: #{fc_forward.1} parent=39 // pred_fallthru
          _
        // Predicated region
        $region45: #{fc_forward.1} parent=39 // pred_check
          %p237 = pneg %p62
        $region46: #{fc_forward.1} parent=39 // pred_check_branch
          %239 = sbr.rel (%p237) target = $region48
        $region47: #{fc_forward.1} parent=39 // pred_region
          %240 = dma.done [#allocation5], 12288
        $region48: #{fc_forward.1} parent=39 // pred_fallthru
          _
        // Predicated region
        $region49: #{fc_forward.1} parent=39 // pred_check
          %p241 = pneg %p104
        $region50: #{fc_forward.1} parent=39 // pred_check_branch
          %243 = sbr.rel (%p241) target = $region52
        $region51: #{fc_forward.1} parent=39 // pred_region
          %244 = dma.done [#allocation5], 18432
        $region52: #{fc_forward.1} parent=39 // pred_fallthru
          _
        %s245 = sand.u32 %s28, 1
        %s246 = scalar_lea.sflag [#allocation3], %s245
        %s247 = sand.u32 %s28, 1
        %s248 = smul.addr %s247, 16
        %s249 = scalar_lea.vmem [#allocation2], %s248
        %p250 = pneg %p41
        %p251 = pneg %p38
        %p252 = pneg %p62
        %p253 = pneg %p59
        %p254 = pneg %p83
        %p255 = pneg %p80
        %p256 = pneg %p104
        %p257 = pneg %p101
        %p258 = pneg %p125
        %p259 = pneg %p122
        %p260 = pneg %p151
        %p261 = pneg %p148
        %p262 = scmp.lt.s32.totalorder %s20, 1
        %s263 = scalar_select %p262, %s20, 1
        %s264 = smul.addr %s263, 3
        %s265 = smul.addr %s264, 8
        %s266 = scalar_lea.vmem %s5, %s265
        %p267 = scmp.lt.s32.totalorder %s20, 1
        %s268 = scalar_select %p267, %s20, 1
        %s269 = smul.addr %s268, 3
        %s270 = smul.addr %s269, 8
        %s271 = scalar_lea.vmem %s5, %s270
        %v272 = vld [vmem:[%s232] sm:$0xff]
        %v273 = vld [vmem:[%s232 + $0x8] sm:$0xff]
        %v274 = vld [vmem:[#allocation4] sm:$0xff]
        %v275 = vld [vmem:[#allocation4 + $0x8] sm:$0xff]
        %v276 = vld [vmem:[#allocation4 + $0x10] sm:$0xff]
        %v277 = vld [vmem:[#allocation4 + $0x18] sm:$0xff]
        %v278 = vld [vmem:[#allocation4 + $0x20] sm:$0xff]
        %v279 = vld [vmem:[#allocation4 + $0x28] sm:$0xff]
        %v280 = vld [vmem:[#allocation4 + $0x30] sm:$0xff]
        %v281 = vld [vmem:[#allocation4 + $0x38] sm:$0xff]
        %v282 = vld [vmem:[#allocation4 + $0x40] sm:$0xff]
        %v283 = vld [vmem:[#allocation4 + $0x48] sm:$0xff]
        %v284 = vld [vmem:[#allocation4 + $0x50] sm:$0xff]
        %v285 = vld [vmem:[#allocation4 + $0x58] sm:$0xff]
        %v286 = vld [vmem:[#allocation4 + $0x60] sm:$0xff]
        %v287 = vld [vmem:[#allocation4 + $0x68] sm:$0xff]
        %v288 = vld [vmem:[#allocation4 + $0x70] sm:$0xff]
        %v289 = vld [vmem:[#allocation4 + $0x78] sm:$0xff]
        %v290 = vld [vmem:[#allocation4 + $0x80] sm:$0xff]
        %v291 = vld [vmem:[#allocation4 + $0x88] sm:$0xff]
        %v292 = vld [vmem:[#allocation4 + $0x90] sm:$0xff]
        %v293 = vld [vmem:[#allocation4 + $0x98] sm:$0xff]
        %v294 = vld [vmem:[#allocation4 + $0xa0] sm:$0xff]
        %v295 = vld [vmem:[#allocation4 + $0xa8] sm:$0xff]
        %v296 = vld [vmem:[#allocation4 + $0xb0] sm:$0xff]
        %v297 = vld [vmem:[#allocation4 + $0xb8] sm:$0xff]
        %v298 = vld [vmem:[#allocation4 + $0xc0] sm:$0xff]
        %v299 = vld [vmem:[#allocation4 + $0xc8] sm:$0xff]
        %v300 = vld [vmem:[#allocation4 + $0xd0] sm:$0xff]
        %v301 = vld [vmem:[#allocation4 + $0xd8] sm:$0xff]
        %v302 = vld [vmem:[#allocation4 + $0xe0] sm:$0xff]
        %v303 = vld [vmem:[#allocation4 + $0xe8] sm:$0xff]
        %v304 = vld [vmem:[#allocation4 + $0xf0] sm:$0xff]
        %v305 = vld [vmem:[#allocation4 + $0xf8] sm:$0xff]
        %v306 = vld [vmem:[#allocation4 + $0x100] sm:$0xff]
        %v307 = vld [vmem:[#allocation4 + $0x108] sm:$0xff]
        %v308 = vld [vmem:[#allocation4 + $0x110] sm:$0xff]
        %v309 = vld [vmem:[#allocation4 + $0x118] sm:$0xff]
        %v310 = vld [vmem:[#allocation4 + $0x120] sm:$0xff]
        %v311 = vld [vmem:[#allocation4 + $0x128] sm:$0xff]
        %v312 = vld [vmem:[#allocation4 + $0x130] sm:$0xff]
        %v313 = vld [vmem:[#allocation4 + $0x138] sm:$0xff]
        %v314 = vld [vmem:[#allocation4 + $0x140] sm:$0xff]
        %v315 = vld [vmem:[#allocation4 + $0x148] sm:$0xff]
        %v316 = vld [vmem:[#allocation4 + $0x150] sm:$0xff]
        %v317 = vld [vmem:[#allocation4 + $0x158] sm:$0xff]
        %v318 = vld [vmem:[#allocation4 + $0x160] sm:$0xff]
        %v319 = vld [vmem:[#allocation4 + $0x168] sm:$0xff]
        %v320 = vld [vmem:[#allocation4 + $0x170] sm:$0xff]
        %v321 = vld [vmem:[#allocation4 + $0x178] sm:$0xff]
        %v322 = vld [vmem:[#allocation4 + $0x180] sm:$0xff]
        %v323 = vld [vmem:[#allocation4 + $0x188] sm:$0xff]
        %v324 = vld [vmem:[#allocation4 + $0x190] sm:$0xff]
        %v325 = vld [vmem:[#allocation4 + $0x198] sm:$0xff]
        %v326 = vld [vmem:[#allocation4 + $0x1a0] sm:$0xff]
        %v327 = vld [vmem:[#allocation4 + $0x1a8] sm:$0xff]
        %v328 = vld [vmem:[#allocation4 + $0x1b0] sm:$0xff]
        %v329 = vld [vmem:[#allocation4 + $0x1b8] sm:$0xff]
        %v330 = vld [vmem:[#allocation4 + $0x1c0] sm:$0xff]
        %v331 = vld [vmem:[#allocation4 + $0x1c8] sm:$0xff]
        %v332 = vld [vmem:[#allocation4 + $0x1d0] sm:$0xff]
        %v333 = vld [vmem:[#allocation4 + $0x1d8] sm:$0xff]
        %v334 = vld [vmem:[#allocation4 + $0x1e0] sm:$0xff]
        %v335 = vld [vmem:[#allocation4 + $0x1e8] sm:$0xff]
        %v336 = vld [vmem:[#allocation4 + $0x1f0] sm:$0xff]
        %v337 = vld [vmem:[#allocation4 + $0x1f8] sm:$0xff]
        %v338 = vld [vmem:[#allocation4 + $0x200] sm:$0xff]
        %v339 = vld [vmem:[#allocation4 + $0x208] sm:$0xff]
        %v340 = vld [vmem:[#allocation4 + $0x210] sm:$0xff]
        %v341 = vld [vmem:[#allocation4 + $0x218] sm:$0xff]
        %v342 = vld [vmem:[#allocation4 + $0x220] sm:$0xff]
        %v343 = vld [vmem:[#allocation4 + $0x228] sm:$0xff]
        %v344 = vld [vmem:[#allocation4 + $0x230] sm:$0xff]
        %v345 = vld [vmem:[#allocation4 + $0x238] sm:$0xff]
        %v346 = vld [vmem:[#allocation4 + $0x240] sm:$0xff]
        %v347 = vld [vmem:[#allocation4 + $0x248] sm:$0xff]
        %v348 = vld [vmem:[#allocation4 + $0x250] sm:$0xff]
        %v349 = vld [vmem:[#allocation4 + $0x258] sm:$0xff]
        %v350 = vld [vmem:[#allocation4 + $0x260] sm:$0xff]
        %v351 = vld [vmem:[#allocation4 + $0x268] sm:$0xff]
        %v352 = vld [vmem:[#allocation4 + $0x270] sm:$0xff]
        %v353 = vld [vmem:[#allocation4 + $0x278] sm:$0xff]
        %v354 = vld [vmem:[#allocation4 + $0x280] sm:$0xff]
        %v355 = vld [vmem:[#allocation4 + $0x288] sm:$0xff]
        %v356 = vld [vmem:[#allocation4 + $0x290] sm:$0xff]
        %v357 = vld [vmem:[#allocation4 + $0x298] sm:$0xff]
        %v358 = vld [vmem:[#allocation4 + $0x2a0] sm:$0xff]
        %v359 = vld [vmem:[#allocation4 + $0x2a8] sm:$0xff]
        %v360 = vld [vmem:[#allocation4 + $0x2b0] sm:$0xff]
        %v361 = vld [vmem:[#allocation4 + $0x2b8] sm:$0xff]
        %v362 = vld [vmem:[#allocation4 + $0x2c0] sm:$0xff]
        %v363 = vld [vmem:[#allocation4 + $0x2c8] sm:$0xff]
        %v364 = vld [vmem:[#allocation4 + $0x2d0] sm:$0xff]
        %v365 = vld [vmem:[#allocation4 + $0x2d8] sm:$0xff]
        %v366 = vld [vmem:[#allocation4 + $0x2e0] sm:$0xff]
        %v367 = vld [vmem:[#allocation4 + $0x2e8] sm:$0xff]
        %v368 = vld [vmem:[#allocation4 + $0x2f0] sm:$0xff]
        %v369 = vld [vmem:[#allocation4 + $0x2f8] sm:$0xff]
        %v370 = vld [vmem:[%s2] sm:$0x7]
        %v372 = vlaneseq
        %v373 = vshrl.u32 %v372, 7
        %v374 = vsub.s32 0, %v373
        %v375 = vrot.slane %v370, %v374
        %v376 = vlaneseq
        %v377 = vshrl.u32 %v376, 7
        %v378 = vsub.s32 1, %v377
        %v379 = vrot.slane %v370, %v378
        %v380 = vlaneseq
        %v381 = vshrl.u32 %v380, 7
        %v382 = vsub.s32 2, %v381
        %v383 = vrot.slane %v370, %v382
        %387 = vmatprep.subr.mxu0 %v275
        %388 = vmatpush1.msra.mxu0 %v274
        %389 = vmatprep.subr.mxu0 %v278
        %390 = vmatpush1.msra.mxu0 %v277
        %391 = vmatprep.subr.mxu0 %v281
        %392 = vmatpush1.msra.mxu0 %v280
        %393 = vmatprep.subr.mxu0 %v284
        %394 = vmatpush1.msra.mxu0 %v283
        %395 = vmatprep.subr.mxu0 %v287
        %396 = vmatpush1.msra.mxu0 %v286
        %397 = vmatprep.subr.mxu0 %v290
        %398 = vmatpush1.msra.mxu0 %v289
        %399 = vmatprep.subr.mxu0 %v293
        %400 = vmatpush1.msra.mxu0 %v292
        %401 = vmatprep.subr.mxu0 %v296
        %402 = vmatpush1.msra.mxu0 %v295
        %403 = vmatprep.subr.mxu0 %v299
        %404 = vmatpush1.msra.mxu0 %v298
        %405 = vmatprep.subr.mxu0 %v302
        %406 = vmatpush1.msra.mxu0 %v301
        %407 = vmatprep.subr.mxu0 %v305
        %408 = vmatpush1.msra.mxu0 %v304
        %409 = vmatprep.subr.mxu0 %v308
        %410 = vmatpush1.msra.mxu0 %v307
        %411 = vmatprep.subr.mxu0 %v311
        %412 = vmatpush1.msra.mxu0 %v310
        %413 = vmatprep.subr.mxu0 %v314
        %414 = vmatpush1.msra.mxu0 %v313
        %415 = vmatprep.subr.mxu0 %v317
        %416 = vmatpush1.msra.mxu0 %v316
        %417 = vmatprep.subr.mxu0 %v320
        %418 = vmatpush1.msra.mxu0 %v319
        %419 = vmatprep.subr.mxu0 %v323
        %420 = vmatpush1.msra.mxu0 %v322
        %421 = vmatprep.subr.mxu0 %v326
        %422 = vmatpush1.msra.mxu0 %v325
        %423 = vmatprep.subr.mxu0 %v329
        %424 = vmatpush1.msra.mxu0 %v328
        %425 = vmatprep.subr.mxu0 %v332
        %426 = vmatpush1.msra.mxu0 %v331
        %427 = vmatprep.subr.mxu0 %v335
        %428 = vmatpush1.msra.mxu0 %v334
        %429 = vmatprep.subr.mxu0 %v338
        %430 = vmatpush1.msra.mxu0 %v337
        %431 = vmatprep.subr.mxu0 %v341
        %432 = vmatpush1.msra.mxu0 %v340
        %433 = vmatprep.subr.mxu0 %v344
        %434 = vmatpush1.msra.mxu0 %v343
        %435 = vmatprep.subr.mxu0 %v347
        %436 = vmatpush1.msra.mxu0 %v346
        %437 = vmatprep.subr.mxu0 %v350
        %438 = vmatpush1.msra.mxu0 %v349
        %439 = vmatprep.subr.mxu0 %v353
        %440 = vmatpush1.msra.mxu0 %v352
        %441 = vmatprep.subr.mxu0 %v356
        %442 = vmatpush1.msra.mxu0 %v355
        %443 = vmatprep.subr.mxu0 %v359
        %444 = vmatpush1.msra.mxu0 %v358
        %445 = vmatprep.subr.mxu0 %v362
        %446 = vmatpush1.msra.mxu0 %v361
        %447 = vmatprep.subr.mxu0 %v365
        %448 = vmatpush1.msra.mxu0 %v364
        %449 = vmatprep.subr.mxu0 %v368
        %450 = vmatpush1.msra.mxu0 %v367
        %451 = vmatprep.mubr.f32.mxu0 %v273
        %452 = vmatmul.mubr.f32.gmra.mrb[0].mxu0 %v272
        %v453 = vpop.f32.mrb[0].mxu0
        %v454 = vadd.f32 %v375, %v453
        %v455 = vpop.f32.mrb[0].mxu0
        %v456 = vadd.f32 %v379, %v455
        %457 = vdwg.mxu0
        %458 = vmatprep.subr.mxu0 0.0
        %459 = vmatpush1.msra.mxu0 %v276
        %460 = vmatprep.subr.mxu0 0.0
        %461 = vmatpush1.msra.mxu0 %v279
        %462 = vmatprep.subr.mxu0 0.0
        %463 = vmatpush1.msra.mxu0 %v282
        %464 = vmatprep.subr.mxu0 0.0
        %465 = vmatpush1.msra.mxu0 %v285
        %466 = vmatprep.subr.mxu0 0.0
        %467 = vmatpush1.msra.mxu0 %v288
        %468 = vmatprep.subr.mxu0 0.0
        %469 = vmatpush1.msra.mxu0 %v291
        %470 = vmatprep.subr.mxu0 0.0
        %471 = vmatpush1.msra.mxu0 %v294
        %472 = vmatprep.subr.mxu0 0.0
        %473 = vmatpush1.msra.mxu0 %v297
        %474 = vmatprep.subr.mxu0 0.0
        %475 = vmatpush1.msra.mxu0 %v300
        %476 = vmatprep.subr.mxu0 0.0
        %477 = vmatpush1.msra.mxu0 %v303
        %478 = vmatprep.subr.mxu0 0.0
        %479 = vmatpush1.msra.mxu0 %v306
        %480 = vmatprep.subr.mxu0 0.0
        %481 = vmatpush1.msra.mxu0 %v309
        %482 = vmatprep.subr.mxu0 0.0
        %483 = vmatpush1.msra.mxu0 %v312
        %484 = vmatprep.subr.mxu0 0.0
        %485 = vmatpush1.msra.mxu0 %v315
        %486 = vmatprep.subr.mxu0 0.0
        %487 = vmatpush1.msra.mxu0 %v318
        %488 = vmatprep.subr.mxu0 0.0
        %489 = vmatpush1.msra.mxu0 %v321
        %490 = vmatprep.subr.mxu0 0.0
        %491 = vmatpush1.msra.mxu0 %v324
        %492 = vmatprep.subr.mxu0 0.0
        %493 = vmatpush1.msra.mxu0 %v327
        %494 = vmatprep.subr.mxu0 0.0
        %495 = vmatpush1.msra.mxu0 %v330
        %496 = vmatprep.subr.mxu0 0.0
        %497 = vmatpush1.msra.mxu0 %v333
        %498 = vmatprep.subr.mxu0 0.0
        %499 = vmatpush1.msra.mxu0 %v336
        %500 = vmatprep.subr.mxu0 0.0
        %501 = vmatpush1.msra.mxu0 %v339
        %502 = vmatprep.subr.mxu0 0.0
        %503 = vmatpush1.msra.mxu0 %v342
        %504 = vmatprep.subr.mxu0 0.0
        %505 = vmatpush1.msra.mxu0 %v345
        %506 = vmatprep.subr.mxu0 0.0
        %507 = vmatpush1.msra.mxu0 %v348
        %508 = vmatprep.subr.mxu0 0.0
        %509 = vmatpush1.msra.mxu0 %v351
        %510 = vmatprep.subr.mxu0 0.0
        %511 = vmatpush1.msra.mxu0 %v354
        %512 = vmatprep.subr.mxu0 0.0
        %513 = vmatpush1.msra.mxu0 %v357
        %514 = vmatprep.subr.mxu0 0.0
        %515 = vmatpush1.msra.mxu0 %v360
        %516 = vmatprep.subr.mxu0 0.0
        %517 = vmatpush1.msra.mxu0 %v363
        %518 = vmatprep.subr.mxu0 0.0
        %519 = vmatpush1.msra.mxu0 %v366
        %520 = vmatprep.subr.mxu0 0.0
        %521 = vmatpush1.msra.mxu0 %v369
        %522 = vmatprep.mubr.f32.mxu0 %v273
        %523 = vmatmul.mubr.f32.gmra.mrb[0].mxu0 %v272
        %v524 = vpop.f32.mrb[0].mxu0
        %v525 = vadd.f32 %v383, %v524
        %v526 = vpop.f32.mrb[0].mxu0
        %527 = vdwg.mxu0
        %v528 = vmax.f32 %v454, 0.0
        %v529 = vmax.f32 %v456, 0.0
        %v530 = vmax.f32 %v525, 0.0
        %v531 = vld [vmem:[#allocation6] sm:$0xff]
        %v532 = vld [vmem:[#allocation6 + $0x8] sm:$0xff]
        %v533 = vld [vmem:[#allocation6 + $0x10] sm:$0xff]
        %v534 = vld [vmem:[#allocation6 + $0x18] sm:$0xff]
        %v535 = vld [vmem:[#allocation6 + $0x20] sm:$0xff]
        %v536 = vld [vmem:[#allocation6 + $0x28] sm:$0xff]
        %v537 = vld [vmem:[#allocation6 + $0x30] sm:$0xff]
        %v538 = vld [vmem:[#allocation6 + $0x38] sm:$0xff]
        %v539 = vld [vmem:[#allocation6 + $0x40] sm:$0xff]
        %v540 = vld [vmem:[#allocation6 + $0x48] sm:$0xff]
        %v541 = vld [vmem:[#allocation6 + $0x50] sm:$0xff]
        %v542 = vld [vmem:[#allocation6 + $0x58] sm:$0xff]
        %v543 = vld [vmem:[#allocation6 + $0x60] sm:$0xff]
        %v544 = vld [vmem:[#allocation6 + $0x68] sm:$0xff]
        %v545 = vld [vmem:[#allocation6 + $0x70] sm:$0xff]
        %v546 = vld [vmem:[#allocation6 + $0x78] sm:$0xff]
        %v547 = vld [vmem:[#allocation6 + $0x80] sm:$0xff]
        %v548 = vld [vmem:[#allocation6 + $0x88] sm:$0xff]
        %v549 = vld [vmem:[#allocation6 + $0x90] sm:$0xff]
        %v550 = vld [vmem:[#allocation6 + $0x98] sm:$0xff]
        %v551 = vld [vmem:[#allocation6 + $0xa0] sm:$0xff]
        %v552 = vld [vmem:[#allocation6 + $0xa8] sm:$0xff]
        %v553 = vld [vmem:[#allocation6 + $0xb0] sm:$0xff]
        %v554 = vld [vmem:[#allocation6 + $0xb8] sm:$0xff]
        %v555 = vld [vmem:[#allocation6 + $0xc0] sm:$0xff]
        %v556 = vld [vmem:[#allocation6 + $0xc8] sm:$0xff]
        %v557 = vld [vmem:[#allocation6 + $0xd0] sm:$0xff]
        %v558 = vld [vmem:[#allocation6 + $0xd8] sm:$0xff]
        %v559 = vld [vmem:[#allocation6 + $0xe0] sm:$0xff]
        %v560 = vld [vmem:[#allocation6 + $0xe8] sm:$0xff]
        %v561 = vld [vmem:[#allocation6 + $0xf0] sm:$0xff]
        %v562 = vld [vmem:[#allocation6 + $0xf8] sm:$0xff]
        %v563 = vld [vmem:[#allocation6 + $0x100] sm:$0xff]
        %v564 = vld [vmem:[#allocation6 + $0x108] sm:$0xff]
        %v565 = vld [vmem:[#allocation6 + $0x110] sm:$0xff]
        %v566 = vld [vmem:[#allocation6 + $0x118] sm:$0xff]
        %v567 = vld [vmem:[#allocation6 + $0x120] sm:$0xff]
        %v568 = vld [vmem:[#allocation6 + $0x128] sm:$0xff]
        %v569 = vld [vmem:[#allocation6 + $0x130] sm:$0xff]
        %v570 = vld [vmem:[#allocation6 + $0x138] sm:$0xff]
        %v571 = vld [vmem:[#allocation6 + $0x140] sm:$0xff]
        %v572 = vld [vmem:[#allocation6 + $0x148] sm:$0xff]
        %v573 = vld [vmem:[#allocation6 + $0x150] sm:$0xff]
        %v574 = vld [vmem:[#allocation6 + $0x158] sm:$0xff]
        %v575 = vld [vmem:[#allocation6 + $0x160] sm:$0xff]
        %v576 = vld [vmem:[#allocation6 + $0x168] sm:$0xff]
        %v577 = vld [vmem:[#allocation6 + $0x170] sm:$0xff]
        %v578 = vld [vmem:[#allocation6 + $0x178] sm:$0xff]
        %v579 = vld [vmem:[#allocation6 + $0x180] sm:$0xff]
        %v580 = vld [vmem:[#allocation6 + $0x188] sm:$0xff]
        %v581 = vld [vmem:[#allocation6 + $0x190] sm:$0xff]
        %v582 = vld [vmem:[#allocation6 + $0x198] sm:$0xff]
        %v583 = vld [vmem:[#allocation6 + $0x1a0] sm:$0xff]
        %v584 = vld [vmem:[#allocation6 + $0x1a8] sm:$0xff]
        %v585 = vld [vmem:[#allocation6 + $0x1b0] sm:$0xff]
        %v586 = vld [vmem:[#allocation6 + $0x1b8] sm:$0xff]
        %v587 = vld [vmem:[#allocation6 + $0x1c0] sm:$0xff]
        %v588 = vld [vmem:[#allocation6 + $0x1c8] sm:$0xff]
        %v589 = vld [vmem:[#allocation6 + $0x1d0] sm:$0xff]
        %v590 = vld [vmem:[#allocation6 + $0x1d8] sm:$0xff]
        %v591 = vld [vmem:[#allocation6 + $0x1e0] sm:$0xff]
        %v592 = vld [vmem:[#allocation6 + $0x1e8] sm:$0xff]
        %v593 = vld [vmem:[#allocation6 + $0x1f0] sm:$0xff]
        %v594 = vld [vmem:[#allocation6 + $0x1f8] sm:$0xff]
        %v595 = vld [vmem:[#allocation6 + $0x200] sm:$0xff]
        %v596 = vld [vmem:[#allocation6 + $0x208] sm:$0xff]
        %v597 = vld [vmem:[#allocation6 + $0x210] sm:$0xff]
        %v598 = vld [vmem:[#allocation6 + $0x218] sm:$0xff]
        %v599 = vld [vmem:[#allocation6 + $0x220] sm:$0xff]
        %v600 = vld [vmem:[#allocation6 + $0x228] sm:$0xff]
        %v601 = vld [vmem:[#allocation6 + $0x230] sm:$0xff]
        %v602 = vld [vmem:[#allocation6 + $0x238] sm:$0xff]
        %v603 = vld [vmem:[#allocation6 + $0x240] sm:$0xff]
        %v604 = vld [vmem:[#allocation6 + $0x248] sm:$0xff]
        %v605 = vld [vmem:[#allocation6 + $0x250] sm:$0xff]
        %v606 = vld [vmem:[#allocation6 + $0x258] sm:$0xff]
        %v607 = vld [vmem:[#allocation6 + $0x260] sm:$0xff]
        %v608 = vld [vmem:[#allocation6 + $0x268] sm:$0xff]
        %v609 = vld [vmem:[#allocation6 + $0x270] sm:$0xff]
        %v610 = vld [vmem:[#allocation6 + $0x278] sm:$0xff]
        %v611 = vld [vmem:[#allocation6 + $0x280] sm:$0xff]
        %v612 = vld [vmem:[#allocation6 + $0x288] sm:$0xff]
        %v613 = vld [vmem:[#allocation6 + $0x290] sm:$0xff]
        %v614 = vld [vmem:[#allocation6 + $0x298] sm:$0xff]
        %v615 = vld [vmem:[#allocation6 + $0x2a0] sm:$0xff]
        %v616 = vld [vmem:[#allocation6 + $0x2a8] sm:$0xff]
        %v617 = vld [vmem:[#allocation6 + $0x2b0] sm:$0xff]
        %v618 = vld [vmem:[#allocation6 + $0x2b8] sm:$0xff]
        %v619 = vld [vmem:[#allocation6 + $0x2c0] sm:$0xff]
        %v620 = vld [vmem:[#allocation6 + $0x2c8] sm:$0xff]
        %v621 = vld [vmem:[#allocation6 + $0x2d0] sm:$0xff]
        %v622 = vld [vmem:[#allocation6 + $0x2d8] sm:$0xff]
        %v623 = vld [vmem:[#allocation6 + $0x2e0] sm:$0xff]
        %v624 = vld [vmem:[#allocation6 + $0x2e8] sm:$0xff]
        %v625 = vld [vmem:[#allocation6 + $0x2f0] sm:$0xff]
        %v626 = vld [vmem:[#allocation6 + $0x2f8] sm:$0xff]
        %v627 = vld [vmem:[#allocation6 + $0x300] sm:$0xff]
        %v628 = vld [vmem:[#allocation6 + $0x308] sm:$0xff]
        %v629 = vld [vmem:[#allocation6 + $0x310] sm:$0xff]
        %v630 = vld [vmem:[#allocation6 + $0x318] sm:$0xff]
        %v631 = vld [vmem:[#allocation6 + $0x320] sm:$0xff]
        %v632 = vld [vmem:[#allocation6 + $0x328] sm:$0xff]
        %v633 = vld [vmem:[#allocation6 + $0x330] sm:$0xff]
        %v634 = vld [vmem:[#allocation6 + $0x338] sm:$0xff]
        %v635 = vld [vmem:[#allocation6 + $0x340] sm:$0xff]
        %v636 = vld [vmem:[#allocation6 + $0x348] sm:$0xff]
        %v637 = vld [vmem:[#allocation6 + $0x350] sm:$0xff]
        %v638 = vld [vmem:[#allocation6 + $0x358] sm:$0xff]
        %v639 = vld [vmem:[#allocation6 + $0x360] sm:$0xff]
        %v640 = vld [vmem:[#allocation6 + $0x368] sm:$0xff]
        %v641 = vld [vmem:[#allocation6 + $0x370] sm:$0xff]
        %v642 = vld [vmem:[#allocation6 + $0x378] sm:$0xff]
        %v643 = vld [vmem:[#allocation6 + $0x380] sm:$0xff]
        %v644 = vld [vmem:[#allocation6 + $0x388] sm:$0xff]
        %v645 = vld [vmem:[#allocation6 + $0x390] sm:$0xff]
        %v646 = vld [vmem:[#allocation6 + $0x398] sm:$0xff]
        %v647 = vld [vmem:[#allocation6 + $0x3a0] sm:$0xff]
        %v648 = vld [vmem:[#allocation6 + $0x3a8] sm:$0xff]
        %v649 = vld [vmem:[#allocation6 + $0x3b0] sm:$0xff]
        %v650 = vld [vmem:[#allocation6 + $0x3b8] sm:$0xff]
        %v651 = vld [vmem:[#allocation6 + $0x3c0] sm:$0xff]
        %v652 = vld [vmem:[#allocation6 + $0x3c8] sm:$0xff]
        %v653 = vld [vmem:[#allocation6 + $0x3d0] sm:$0xff]
        %v654 = vld [vmem:[#allocation6 + $0x3d8] sm:$0xff]
        %v655 = vld [vmem:[#allocation6 + $0x3e0] sm:$0xff]
        %v656 = vld [vmem:[#allocation6 + $0x3e8] sm:$0xff]
        %v657 = vld [vmem:[#allocation6 + $0x3f0] sm:$0xff]
        %v658 = vld [vmem:[#allocation6 + $0x3f8] sm:$0xff]
        %v659 = vld [vmem:[#allocation6 + $0x400] sm:$0xff]
        %v660 = vld [vmem:[#allocation6 + $0x408] sm:$0xff]
        %v661 = vld [vmem:[#allocation6 + $0x410] sm:$0xff]
        %v662 = vld [vmem:[#allocation6 + $0x418] sm:$0xff]
        %v663 = vld [vmem:[#allocation6 + $0x420] sm:$0xff]
        %v664 = vld [vmem:[#allocation6 + $0x428] sm:$0xff]
        %v665 = vld [vmem:[#allocation6 + $0x430] sm:$0xff]
        %v666 = vld [vmem:[#allocation6 + $0x438] sm:$0xff]
        %v667 = vld [vmem:[#allocation6 + $0x440] sm:$0xff]
        %v668 = vld [vmem:[#allocation6 + $0x448] sm:$0xff]
        %v669 = vld [vmem:[#allocation6 + $0x450] sm:$0xff]
        %v670 = vld [vmem:[#allocation6 + $0x458] sm:$0xff]
        %v671 = vld [vmem:[#allocation6 + $0x460] sm:$0xff]
        %v672 = vld [vmem:[#allocation6 + $0x468] sm:$0xff]
        %v673 = vld [vmem:[#allocation6 + $0x470] sm:$0xff]
        %v674 = vld [vmem:[#allocation6 + $0x478] sm:$0xff]
        %v675 = vld [vmem:[%s4] sm:$0x7]
        %v677 = vlaneseq
        %v678 = vshrl.u32 %v677, 7
        %v679 = vsub.s32 0, %v678
        %v680 = vrot.slane %v675, %v679
        %v681 = vlaneseq
        %v682 = vshrl.u32 %v681, 7
        %v683 = vsub.s32 1, %v682
        %v684 = vrot.slane %v675, %v683
        %v685 = vlaneseq
        %v686 = vshrl.u32 %v685, 7
        %v687 = vsub.s32 2, %v686
        %v688 = vrot.slane %v675, %v687
        %692 = vmatprep.subr.mxu0 %v532
        %693 = vmatpush1.msra.mxu0 %v531
        %694 = vmatprep.subr.mxu0 %v535
        %695 = vmatpush1.msra.mxu0 %v534
        %696 = vmatprep.subr.mxu0 %v538
        %697 = vmatpush1.msra.mxu0 %v537
        %698 = vmatprep.subr.mxu0 %v541
        %699 = vmatpush1.msra.mxu0 %v540
        %700 = vmatprep.subr.mxu0 %v544
        %701 = vmatpush1.msra.mxu0 %v543
        %702 = vmatprep.subr.mxu0 %v547
        %703 = vmatpush1.msra.mxu0 %v546
        %704 = vmatprep.subr.mxu0 %v550
        %705 = vmatpush1.msra.mxu0 %v549
        %706 = vmatprep.subr.mxu0 %v553
        %707 = vmatpush1.msra.mxu0 %v552
        %708 = vmatprep.subr.mxu0 %v556
        %709 = vmatpush1.msra.mxu0 %v555
        %710 = vmatprep.subr.mxu0 %v559
        %711 = vmatpush1.msra.mxu0 %v558
        %712 = vmatprep.subr.mxu0 %v562
        %713 = vmatpush1.msra.mxu0 %v561
        %714 = vmatprep.subr.mxu0 %v565
        %715 = vmatpush1.msra.mxu0 %v564
        %716 = vmatprep.subr.mxu0 %v568
        %717 = vmatpush1.msra.mxu0 %v567
        %718 = vmatprep.subr.mxu0 %v571
        %719 = vmatpush1.msra.mxu0 %v570
        %720 = vmatprep.subr.mxu0 %v574
        %721 = vmatpush1.msra.mxu0 %v573
        %722 = vmatprep.subr.mxu0 %v577
        %723 = vmatpush1.msra.mxu0 %v576
        %724 = vmatprep.subr.mxu0 %v580
        %725 = vmatpush1.msra.mxu0 %v579
        %726 = vmatprep.subr.mxu0 %v583
        %727 = vmatpush1.msra.mxu0 %v582
        %728 = vmatprep.subr.mxu0 %v586
        %729 = vmatpush1.msra.mxu0 %v585
        %730 = vmatprep.subr.mxu0 %v589
        %731 = vmatpush1.msra.mxu0 %v588
        %732 = vmatprep.subr.mxu0 %v592
        %733 = vmatpush1.msra.mxu0 %v591
        %734 = vmatprep.subr.mxu0 %v595
        %735 = vmatpush1.msra.mxu0 %v594
        %736 = vmatprep.subr.mxu0 %v598
        %737 = vmatpush1.msra.mxu0 %v597
        %738 = vmatprep.subr.mxu0 %v601
        %739 = vmatpush1.msra.mxu0 %v600
        %740 = vmatprep.subr.mxu0 %v604
        %741 = vmatpush1.msra.mxu0 %v603
        %742 = vmatprep.subr.mxu0 %v607
        %743 = vmatpush1.msra.mxu0 %v606
        %744 = vmatprep.subr.mxu0 %v610
        %745 = vmatpush1.msra.mxu0 %v609
        %746 = vmatprep.subr.mxu0 %v613
        %747 = vmatpush1.msra.mxu0 %v612
        %748 = vmatprep.subr.mxu0 %v616
        %749 = vmatpush1.msra.mxu0 %v615
        %750 = vmatprep.subr.mxu0 %v619
        %751 = vmatpush1.msra.mxu0 %v618
        %752 = vmatprep.subr.mxu0 %v622
        %753 = vmatpush1.msra.mxu0 %v621
        %754 = vmatprep.subr.mxu0 %v625
        %755 = vmatpush1.msra.mxu0 %v624
        %756 = vmatprep.mubr.f32.mxu0 %v529
        %757 = vmatmul.mubr.f32.gmra.mrb[0].mxu0 %v528
        %v758 = vpop.f32.mrb[0].mxu0
        %v759 = vadd.f32 %v680, %v758
        %v760 = vpop.f32.mrb[0].mxu0
        %v761 = vadd.f32 %v684, %v760
        %762 = vdwg.mxu0
        %763 = vmatprep.subr.mxu0 %v628
        %764 = vmatpush1.msra.mxu0 %v627
        %765 = vmatprep.subr.mxu0 %v631
        %766 = vmatpush1.msra.mxu0 %v630
        %767 = vmatprep.subr.mxu0 %v634
        %768 = vmatpush1.msra.mxu0 %v633
        %769 = vmatprep.subr.mxu0 %v637
        %770 = vmatpush1.msra.mxu0 %v636
        %771 = vmatprep.subr.mxu0 %v640
        %772 = vmatpush1.msra.mxu0 %v639
        %773 = vmatprep.subr.mxu0 %v643
        %774 = vmatpush1.msra.mxu0 %v642
        %775 = vmatprep.subr.mxu0 %v646
        %776 = vmatpush1.msra.mxu0 %v645
        %777 = vmatprep.subr.mxu0 %v649
        %778 = vmatpush1.msra.mxu0 %v648
        %779 = vmatprep.subr.mxu0 %v652
        %780 = vmatpush1.msra.mxu0 %v651
        %781 = vmatprep.subr.mxu0 %v655
        %782 = vmatpush1.msra.mxu0 %v654
        %783 = vmatprep.subr.mxu0 %v658
        %784 = vmatpush1.msra.mxu0 %v657
        %785 = vmatprep.subr.mxu0 %v661
        %786 = vmatpush1.msra.mxu0 %v660
        %787 = vmatprep.subr.mxu0 %v664
        %788 = vmatpush1.msra.mxu0 %v663
        %789 = vmatprep.subr.mxu0 %v667
        %790 = vmatpush1.msra.mxu0 %v666
        %791 = vmatprep.subr.mxu0 %v670
        %792 = vmatpush1.msra.mxu0 %v669
        %793 = vmatprep.subr.mxu0 %v673
        %794 = vmatpush1.msra.mxu0 %v672
        %795 = vmatprep.subr.mxu0 0.0
        %796 = vmatpush1.msra.mxu0 0.0
        %797 = vmatprep.subr.mxu0 0.0
        %798 = vmatpush1.msra.mxu0 0.0
        %799 = vmatprep.subr.mxu0 0.0
        %800 = vmatpush1.msra.mxu0 0.0
        %801 = vmatprep.subr.mxu0 0.0
        %802 = vmatpush1.msra.mxu0 0.0
        %803 = vmatprep.subr.mxu0 0.0
        %804 = vmatpush1.msra.mxu0 0.0
        %805 = vmatprep.subr.mxu0 0.0
        %806 = vmatpush1.msra.mxu0 0.0
        %807 = vmatprep.subr.mxu0 0.0
        %808 = vmatpush1.msra.mxu0 0.0
        %809 = vmatprep.subr.mxu0 0.0
        %810 = vmatpush1.msra.mxu0 0.0
        %811 = vmatprep.subr.mxu0 0.0
        %812 = vmatpush1.msra.mxu0 0.0
        %813 = vmatprep.subr.mxu0 0.0
        %814 = vmatpush1.msra.mxu0 0.0
        %815 = vmatprep.subr.mxu0 0.0
        %816 = vmatpush1.msra.mxu0 0.0
        %817 = vmatprep.subr.mxu0 0.0
        %818 = vmatpush1.msra.mxu0 0.0
        %819 = vmatprep.subr.mxu0 0.0
        %820 = vmatpush1.msra.mxu0 0.0
        %821 = vmatprep.subr.mxu0 0.0
        %822 = vmatpush1.msra.mxu0 0.0
        %823 = vmatprep.subr.mxu0 0.0
        %824 = vmatpush1.msra.mxu0 0.0
        %825 = vmatprep.subr.mxu0 0.0
        %826 = vmatpush1.msra.mxu0 0.0
        %827 = vmatprep.mubr.f32.mxu0 0.0
        %828 = vmatmul.mubr.f32.gmra.mrb[0].mxu0 %v530
        %v829 = vpop.f32.mrb[0].mxu0
        %v830 = vadd.f32 %v759, %v829
        %v831 = vpop.f32.mrb[0].mxu0
        %v832 = vadd.f32 %v761, %v831
        %833 = vdwg.mxu0
        %834 = vmatprep.subr.mxu0 0.0
        %835 = vmatpush1.msra.mxu0 %v533
        %836 = vmatprep.subr.mxu0 0.0
        %837 = vmatpush1.msra.mxu0 %v536
        %838 = vmatprep.subr.mxu0 0.0
        %839 = vmatpush1.msra.mxu0 %v539
        %840 = vmatprep.subr.mxu0 0.0
        %841 = vmatpush1.msra.mxu0 %v542
        %842 = vmatprep.subr.mxu0 0.0
        %843 = vmatpush1.msra.mxu0 %v545
        %844 = vmatprep.subr.mxu0 0.0
        %845 = vmatpush1.msra.mxu0 %v548
        %846 = vmatprep.subr.mxu0 0.0
        %847 = vmatpush1.msra.mxu0 %v551
        %848 = vmatprep.subr.mxu0 0.0
        %849 = vmatpush1.msra.mxu0 %v554
        %850 = vmatprep.subr.mxu0 0.0
        %851 = vmatpush1.msra.mxu0 %v557
        %852 = vmatprep.subr.mxu0 0.0
        %853 = vmatpush1.msra.mxu0 %v560
        %854 = vmatprep.subr.mxu0 0.0
        %855 = vmatpush1.msra.mxu0 %v563
        %856 = vmatprep.subr.mxu0 0.0
        %857 = vmatpush1.msra.mxu0 %v566
        %858 = vmatprep.subr.mxu0 0.0
        %859 = vmatpush1.msra.mxu0 %v569
        %860 = vmatprep.subr.mxu0 0.0
        %861 = vmatpush1.msra.mxu0 %v572
        %862 = vmatprep.subr.mxu0 0.0
        %863 = vmatpush1.msra.mxu0 %v575
        %864 = vmatprep.subr.mxu0 0.0
        %865 = vmatpush1.msra.mxu0 %v578
        %866 = vmatprep.subr.mxu0 0.0
        %867 = vmatpush1.msra.mxu0 %v581
        %868 = vmatprep.subr.mxu0 0.0
        %869 = vmatpush1.msra.mxu0 %v584
        %870 = vmatprep.subr.mxu0 0.0
        %871 = vmatpush1.msra.mxu0 %v587
        %872 = vmatprep.subr.mxu0 0.0
        %873 = vmatpush1.msra.mxu0 %v590
        %874 = vmatprep.subr.mxu0 0.0
        %875 = vmatpush1.msra.mxu0 %v593
        %876 = vmatprep.subr.mxu0 0.0
        %877 = vmatpush1.msra.mxu0 %v596
        %878 = vmatprep.subr.mxu0 0.0
        %879 = vmatpush1.msra.mxu0 %v599
        %880 = vmatprep.subr.mxu0 0.0
        %881 = vmatpush1.msra.mxu0 %v602
        %882 = vmatprep.subr.mxu0 0.0
        %883 = vmatpush1.msra.mxu0 %v605
        %884 = vmatprep.subr.mxu0 0.0
        %885 = vmatpush1.msra.mxu0 %v608
        %886 = vmatprep.subr.mxu0 0.0
        %887 = vmatpush1.msra.mxu0 %v611
        %888 = vmatprep.subr.mxu0 0.0
        %889 = vmatpush1.msra.mxu0 %v614
        %890 = vmatprep.subr.mxu0 0.0
        %891 = vmatpush1.msra.mxu0 %v617
        %892 = vmatprep.subr.mxu0 0.0
        %893 = vmatpush1.msra.mxu0 %v620
        %894 = vmatprep.subr.mxu0 0.0
        %895 = vmatpush1.msra.mxu0 %v623
        %896 = vmatprep.subr.mxu0 0.0
        %897 = vmatpush1.msra.mxu0 %v626
        %898 = vmatprep.mubr.f32.mxu0 %v529
        %899 = vmatmul.mubr.f32.gmra.mrb[0].mxu0 %v528
        %v900 = vpop.f32.mrb[0].mxu0
        %v901 = vadd.f32 %v688, %v900
        %v902 = vpop.f32.mrb[0].mxu0
        %903 = vdwg.mxu0
        %904 = vmatprep.subr.mxu0 0.0
        %905 = vmatpush1.msra.mxu0 %v629
        %906 = vmatprep.subr.mxu0 0.0
        %907 = vmatpush1.msra.mxu0 %v632
        %908 = vmatprep.subr.mxu0 0.0
        %909 = vmatpush1.msra.mxu0 %v635
        %910 = vmatprep.subr.mxu0 0.0
        %911 = vmatpush1.msra.mxu0 %v638
        %912 = vmatprep.subr.mxu0 0.0
        %913 = vmatpush1.msra.mxu0 %v641
        %914 = vmatprep.subr.mxu0 0.0
        %915 = vmatpush1.msra.mxu0 %v644
        %916 = vmatprep.subr.mxu0 0.0
        %917 = vmatpush1.msra.mxu0 %v647
        %918 = vmatprep.subr.mxu0 0.0
        %919 = vmatpush1.msra.mxu0 %v650
        %920 = vmatprep.subr.mxu0 0.0
        %921 = vmatpush1.msra.mxu0 %v653
        %922 = vmatprep.subr.mxu0 0.0
        %923 = vmatpush1.msra.mxu0 %v656
        %924 = vmatprep.subr.mxu0 0.0
        %925 = vmatpush1.msra.mxu0 %v659
        %926 = vmatprep.subr.mxu0 0.0
        %927 = vmatpush1.msra.mxu0 %v662
        %928 = vmatprep.subr.mxu0 0.0
        %929 = vmatpush1.msra.mxu0 %v665
        %930 = vmatprep.subr.mxu0 0.0
        %931 = vmatpush1.msra.mxu0 %v668
        %932 = vmatprep.subr.mxu0 0.0
        %933 = vmatpush1.msra.mxu0 %v671
        %934 = vmatprep.subr.mxu0 0.0
        %935 = vmatpush1.msra.mxu0 %v674
        %936 = vmatprep.subr.mxu0 0.0
        %937 = vmatpush1.msra.mxu0 0.0
        %938 = vmatprep.subr.mxu0 0.0
        %939 = vmatpush1.msra.mxu0 0.0
        %940 = vmatprep.subr.mxu0 0.0
        %941 = vmatpush1.msra.mxu0 0.0
        %942 = vmatprep.subr.mxu0 0.0
        %943 = vmatpush1.msra.mxu0 0.0
        %944 = vmatprep.subr.mxu0 0.0
        %945 = vmatpush1.msra.mxu0 0.0
        %946 = vmatprep.subr.mxu0 0.0
        %947 = vmatpush1.msra.mxu0 0.0
        %948 = vmatprep.subr.mxu0 0.0
        %949 = vmatpush1.msra.mxu0 0.0
        %950 = vmatprep.subr.mxu0 0.0
        %951 = vmatpush1.msra.mxu0 0.0
        %952 = vmatprep.subr.mxu0 0.0
        %953 = vmatpush1.msra.mxu0 0.0
        %954 = vmatprep.subr.mxu0 0.0
        %955 = vmatpush1.msra.mxu0 0.0
        %956 = vmatprep.subr.mxu0 0.0
        %957 = vmatpush1.msra.mxu0 0.0
        %958 = vmatprep.subr.mxu0 0.0
        %959 = vmatpush1.msra.mxu0 0.0
        %960 = vmatprep.subr.mxu0 0.0
        %961 = vmatpush1.msra.mxu0 0.0
        %962 = vmatprep.subr.mxu0 0.0
        %963 = vmatpush1.msra.mxu0 0.0
        %964 = vmatprep.subr.mxu0 0.0
        %965 = vmatpush1.msra.mxu0 0.0
        %966 = vmatprep.subr.mxu0 0.0
        %967 = vmatpush1.msra.mxu0 0.0
        %968 = vmatprep.mubr.f32.mxu0 0.0
        %969 = vmatmul.mubr.f32.gmra.mrb[0].mxu0 %v530
        %v970 = vpop.f32.mrb[0].mxu0
        %v971 = vadd.f32 %v901, %v970
        %v972 = vpop.f32.mrb[0].mxu0
        %973 = vdwg.mxu0
        %v974 = vmul.f32 %v830, 0.5
        %v975 = vmul.f32 %v832, 0.5
        %v976 = vmul.f32 %v971, 0.5
        %v977 = vtanh.pop %v974
        %v978 = vtanh.pop %v975
        %v979 = vtanh.pop %v976
        %v980 = vadd.f32 %v977, 1.0
        %v981 = vadd.f32 %v978, 1.0
        %v982 = vadd.f32 %v979, 1.0
        %v983 = vmul.f32 %v980, 0.5
        %v984 = vmul.f32 %v981, 0.5
        %v985 = vmul.f32 %v982, 0.5
        %986 = vst [vmem:[%s271] sm:$0xff] %v983
        %987 = vst [vmem:[%s271 + $0x8] sm:$0xff] %v984
        %988 = vst [vmem:[%s271 + $0x10] sm:$0xff] %v985
        %p989 = scmp.lt.s32.totalorder %s20, 1
        %s990 = scalar_select %p989, %s20, 1
        %s991 = smul.addr %s990, 3
        %s992 = smul.addr %s991, 8
        %s993 = scalar_lea.vmem %s5, %s992
        // Predicated region
        $region53: #{fc_forward.1} parent=39 // pred_check
          %p994 = pneg %p148
        $region54: #{fc_forward.1} parent=39 // pred_check_branch
          %996 = sbr.rel (%p994) target = $region56
        $region55: #{fc_forward.1} parent=39 // pred_region
          _
        $region56: #{fc_forward.1} parent=39 // pred_fallthru
          _
      $region40: #{fc_forward.1} parent=5 // pred_fallthru
        _
      %p997 = scmp.le.s32.totalorder 2, %s15
      // Predicated region
      $region57: #{fc_forward.1} parent=5 // pred_check
        %p998 = pneg %p997
      $region58: #{fc_forward.1} parent=5 // pred_check_branch
        %1000 = sbr.rel (%p998) target = $region60
      $region59: #{fc_forward.1} parent=5 // pred_region
        %s1001 = ssub.s32 %s15, 2
        // Predicated region
        $region61: #{fc_forward.1} parent=59 // pred_check
          %p1002 = pneg %p154
        $region62: #{fc_forward.1} parent=59 // pred_check_branch
          %1004 = sbr.rel (%p1002) target = $region64
        $region63: #{fc_forward.1} parent=59 // pred_region
          %p1005 = scmp.lt.s32.totalorder %s21, 1
          %s1006 = scalar_select %p1005, %s21, 1
          %s1007 = smul.addr %s1006, 3
          %s1008 = smul.addr %s1007, 8
          %s1009 = scalar_lea.vmem %s5, %s1008
        $region64: #{fc_forward.1} parent=59 // pred_fallthru
          _
      $region60: #{fc_forward.1} parent=5 // pred_fallthru
        _
    $region6: #{fc_forward.1} parent=1 // loop_footer
      %s19 = sadd.s32 1, %s15
    $region7: #{fc_forward.1} parent=1 // loop_footer_branch
      %14 = sbr.rel target = $region3
    $region8: #{fc_forward.1} parent=1 // loop_exit
      _
    %1010 = vsyncpa [#allocation3], 1
    %s1011 = scalar_lea.sflag [#allocation3], 1
    %1012 = vsyncpa %s1011, 1
    %1013 = vsyncpa [#allocation5], 1

</llo_original>
